<compile_context>
chip_gen: v7x
topology: tpu7x:2x2x1
jax: 0.10.0
libtpu: 0.0.40
codegen_flags: <defaults>
</compile_context>

<pallas_src>
import functools

import jax
import jax.numpy as jnp
from jax.experimental import pallas as pl
from jax.experimental.pallas import tpu as pltpu


# ----------------------------------------------------------------------------
# Tiling helpers
# ----------------------------------------------------------------------------
def _pick_tm(m, tm_max=4096):
    """Pixel-tile width: multiple of 128 (lane-dense), capped at tm_max, never
    exceeding M (the ragged tail is a partial last grid block, masked by
    Pallas, instead of a jnp.pad HBM pass)."""
    if m <= 128:
        return m
    return min(tm_max, (m // 128) * 128)


def _stream_spec(block_shape, index_map, n_steps):
    """BlockSpec for the streamed activation tiles; request 3-deep buffering
    when there are enough grid steps for it to matter."""
    if n_steps >= 3:
        try:
            return pl.BlockSpec(block_shape, index_map,
                                pipeline_mode=pl.Buffered(3))
        except (AttributeError, TypeError):
            pass
    return pl.BlockSpec(block_shape, index_map)


# ----------------------------------------------------------------------------
# Pallas kernels (channel-major: operands are (channels, pixels))
# ----------------------------------------------------------------------------
def _conv_bias_relu_kernel(x_ref, w_ref, b_ref, o_ref):
    # x: (K, TM) bf16, w: (C, K) bf16, b: (C, 1) f32  ->  o: (C, TM)
    acc = jnp.dot(w_ref[...], x_ref[...], preferred_element_type=jnp.float32)
    acc = jnp.maximum(acc + b_ref[...], 0.0)        # bias lane-broadcast + ReLU
    o_ref[...] = acc.astype(o_ref.dtype)


def _conv_head_fused_kernel(x_ref, w_ref, b_ref, wh_ref, bh_ref,
                            cls_ref, reg_ref, *, nc):
    # conv2: (C, K) @ (K, TM) -> (C, TM) f32, bias + ReLU.
    f = jnp.dot(w_ref[...], x_ref[...], preferred_element_type=jnp.float32)
    f = jnp.maximum(f + b_ref[...], 0.0)
    # Fused cls+reg 1x1 head: (Nh, C) @ (C, TM); feature map never leaves VMEM.
    h = jnp.dot(wh_ref[...], f.astype(wh_ref.dtype),
                preferred_element_type=jnp.float32)
    h = h + bh_ref[...]
    cls_ref[...] = h[:nc].astype(cls_ref.dtype)
    reg_ref[...] = h[nc:].astype(reg_ref.dtype)


# ----------------------------------------------------------------------------
# Wrappers: (batch, pixel-tile) grid, weights VMEM-resident
# ----------------------------------------------------------------------------
def conv_bias_relu_pallas(cols, w_t, b, *, out_dtype=jnp.bfloat16, tm_max=4096):
    """cols: (B, K, M) bf16, w_t: (C, K) bf16, b: (C,) f32 -> (B, C, M)."""
    B, K, M = cols.shape
    C = w_t.shape[0]
    tm = _pick_tm(M, tm_max)
    n_m = pl.cdiv(M, tm)
    return pl.pallas_call(
        _conv_bias_relu_kernel,
        out_shape=jax.ShapeDtypeStruct((B, C, M), out_dtype),
        grid=(B, n_m),
        in_specs=[
            _stream_spec((None, K, tm), lambda bi, mi: (bi, 0, mi), n_m),
            pl.BlockSpec((C, K), lambda bi, mi: (0, 0)),   # resident
            pl.BlockSpec((C, 1), lambda bi, mi: (0, 0)),   # resident
        ],
        out_specs=pl.BlockSpec((None, C, tm), lambda bi, mi: (bi, 0, mi)),
        compiler_params=pltpu.CompilerParams(
            dimension_semantics=("parallel", "parallel")),
    )(cols, w_t, b.reshape(C, 1))


def conv_head_fused_pallas(cols, w2_t, b2, wh_t, bh, *, num_classes,
                           tm_max=4096):
    """Fused conv2 (+bias+ReLU) and 1x1 cls/reg head.

    cols: (B, K, M) bf16, w2_t: (C, K) bf16, b2: (C,) f32,
    wh_t: (Nh, C) bf16, bh: (Nh,) f32  ->  ((B, nc, M), (B, Nh-nc, M)) f32.
    """
    B, K, M = cols.shape
    C = w2_t.shape[0]
    Nh = wh_t.shape[0]
    nc = num_classes
    tm = _pick_tm(M, tm_max)
    n_m = pl.cdiv(M, tm)
    kernel = functools.partial(_conv_head_fused_kernel, nc=nc)
    return pl.pallas_call(
        kernel,
        out_shape=(jax.ShapeDtypeStruct((B, nc, M), jnp.float32),
                   jax.ShapeDtypeStruct((B, Nh - nc, M), jnp.float32)),
        grid=(B, n_m),
        in_specs=[
            _stream_spec((None, K, tm), lambda bi, mi: (bi, 0, mi), n_m),
            pl.BlockSpec((C, K), lambda bi, mi: (0, 0)),
            pl.BlockSpec((C, 1), lambda bi, mi: (0, 0)),
            pl.BlockSpec((Nh, C), lambda bi, mi: (0, 0)),
            pl.BlockSpec((Nh, 1), lambda bi, mi: (0, 0)),
        ],
        out_specs=(
            pl.BlockSpec((None, nc, tm), lambda bi, mi: (bi, 0, mi)),
            pl.BlockSpec((None, Nh - nc, tm), lambda bi, mi: (bi, 0, mi)),
        ),
        compiler_params=pltpu.CompilerParams(
            dimension_semantics=("parallel", "parallel")),
    )(cols, w2_t, b2.reshape(C, 1), wh_t, bh.reshape(Nh, 1))


# ----------------------------------------------------------------------------
# Plain-JAX glue: channel-first im2col straight from NCHW (no transposes)
# ----------------------------------------------------------------------------
def extract_patches_nchw(x_nchw, kh, kw, stride, pad):
    """x: (B, C, H, W) -> patches (B, kh*kw*C, Ho*Wo); K order = (tap, cin)."""
    B, C, H, W = x_nchw.shape
    x = jnp.pad(x_nchw, ((0, 0), (0, 0), (pad, pad), (pad, pad)))
    Hp, Wp = H + 2 * pad, W + 2 * pad
    Ho = (Hp - kh) // stride + 1
    Wo = (Wp - kw) // stride + 1
    taps = []
    for i in range(kh):
        for j in range(kw):
            taps.append(x[:, :, i:i + Ho * stride:stride,
                          j:j + Wo * stride:stride])
    p = jnp.stack(taps, axis=1)                       # (B, kh*kw, C, Ho, Wo)
    return p.reshape(B, kh * kw * C, Ho * Wo), (Ho, Wo)


# ----------------------------------------------------------------------------
# Detector: parameter init + forward
# ----------------------------------------------------------------------------
def init_params(key, in_ch=3, c1=16, c2=32, num_classes=4):
    ks = jax.random.split(key, 8)
    scale = 0.05
    return {
        # conv weights stored as (Cout, kh*kw*Cin) with K ordered (tap, cin)
        "w1_t": scale * jax.random.normal(ks[0], (c1, 3 * 3 * in_ch), jnp.float32),
        "b1": scale * jax.random.normal(ks[1], (c1,), jnp.float32),
        "w2_t": scale * jax.random.normal(ks[2], (c2, 3 * 3 * c1), jnp.float32),
        "b2": scale * jax.random.normal(ks[3], (c2,), jnp.float32),
        "w_cls_t": scale * jax.random.normal(ks[4], (num_classes, c2), jnp.float32),
        "b_cls": scale * jax.random.normal(ks[5], (num_classes,), jnp.float32),
        "w_reg_t": scale * jax.random.normal(ks[6], (4, c2), jnp.float32),
        "b_reg": scale * jax.random.normal(ks[7], (4,), jnp.float32),
    }


@jax.jit
def detector_forward(params, imgs_nchw):
    """imgs_nchw: (B, C, H, W) f32 -> (cls_logits NCHW f32, bbox_reg NCHW f32)."""
    bf16 = jnp.bfloat16
    B = imgs_nchw.shape[0]

    # Cast BEFORE im2col so the expanded patch arrays live in HBM at 2 B/elem.
    x = imgs_nchw.astype(bf16)

    # ---- backbone conv1 (3x3, stride 2, pad 1) + ReLU ----
    cols1, (H1, W1) = extract_patches_nchw(x, 3, 3, 2, 1)        # (B, 27, M1)
    f1 = conv_bias_relu_pallas(cols1, params["w1_t"].astype(bf16),
                               params["b1"], out_dtype=bf16)     # (B, 16, M1)
    c1 = params["w1_t"].shape[0]
    f1 = f1.reshape(B, c1, H1, W1)                               # NCHW, free

    # ---- backbone conv2 (3x3, stride 2, pad 1) + ReLU, fused cls/reg head ----
    cols2, (H2, W2) = extract_patches_nchw(f1, 3, 3, 2, 1)       # (B, 144, M2)
    wh_t = jnp.concatenate([params["w_cls_t"], params["w_reg_t"]], axis=0)
    bh = jnp.concatenate([params["b_cls"], params["b_reg"]], axis=0)
    nc = params["w_cls_t"].shape[0]
    cls, reg = conv_head_fused_pallas(cols2, params["w2_t"].astype(bf16),
                                      params["b2"], wh_t.astype(bf16), bh,
                                      num_classes=nc)
    # TODO(synk): bbox/category target assignment & losses from the original
    # head are training-time logic with no kernel hot path; forward returns
    # the raw cls/reg maps.
    return cls.reshape(B, nc, H2, W2), reg.reshape(B, -1, H2, W2)


def detector_forward_ref(params, imgs_nchw):
    """Pure-JAX reference following the same bf16-in / f32-accumulate math."""
    bf16, f32 = jnp.bfloat16, jnp.float32
    hp = jax.lax.Precision.HIGHEST
    B = imgs_nchw.shape[0]
    x = imgs_nchw.astype(bf16)

    cols1, (H1, W1) = extract_patches_nchw(x, 3, 3, 2, 1)
    w1 = params["w1_t"].astype(bf16).astype(f32)
    a1 = jnp.einsum("ck,bkm->bcm", w1, cols1.astype(f32),
                    precision=hp) + params["b1"][None, :, None]
    f1 = jnp.maximum(a1, 0.0).astype(bf16)
    c1 = w1.shape[0]
    f1 = f1.reshape(B, c1, H1, W1)

    cols2, (H2, W2) = extract_patches_nchw(f1, 3, 3, 2, 1)
    w2 = params["w2_t"].astype(bf16).astype(f32)
    a2 = jnp.einsum("ck,bkm->bcm", w2, cols2.astype(f32),
                    precision=hp) + params["b2"][None, :, None]
    f2 = jnp.maximum(a2, 0.0)

    wh = jnp.concatenate([params["w_cls_t"], params["w_reg_t"]], axis=0)
    wh = wh.astype(bf16).astype(f32)
    bh = jnp.concatenate([params["b_cls"], params["b_reg"]], axis=0)
    h = jnp.einsum("nc,bcm->bnm", wh, f2.astype(bf16).astype(f32),
                   precision=hp) + bh[None, :, None]
    nc = params["w_cls_t"].shape[0]
    return (h[:, :nc].reshape(B, nc, H2, W2),
            h[:, nc:].reshape(B, -1, H2, W2))


if __name__ == "__main__":
    key = jax.random.PRNGKey(0)
    k_img, _ = jax.random.split(key)

    B, C, H, W = 2, 3, 16, 16
    imgs = jax.random.normal(k_img, (B, C, H, W), jnp.float32)
    params = init_params(jax.random.PRNGKey(42), in_ch=C, c1=16, c2=32,
                         num_classes=4)

    cls_out, reg_out = detector_forward(params, imgs)
    jax.block_until_ready((cls_out, reg_out))

    cls_ref, reg_ref = detector_forward_ref(params, imgs)
    assert cls_out.shape == (B, 4, H // 4, W // 4), cls_out.shape
    assert reg_out.shape == (B, 4, H // 4, W // 4), reg_out.shape
    assert jnp.allclose(cls_out, cls_ref, atol=2e-3, rtol=2e-2), (
        float(jnp.max(jnp.abs(cls_out - cls_ref))))
    assert jnp.allclose(reg_out, reg_ref, atol=2e-3, rtol=2e-2), (
        float(jnp.max(jnp.abs(reg_out - reg_ref))))

    print("KERNEL_OK")
</pallas_src>

<mosaic_0001>
module attributes {stable_mosaic.version = 11 : i64} {
  func.func @_conv_bias_relu_kernel(%arg0: i32, %arg1: i32, %arg2: memref<1x27x64xbf16, #tpu.memory_space<vmem>>, %arg3: memref<16x27xbf16, #tpu.memory_space<vmem>>, %arg4: memref<16x1xf32, #tpu.memory_space<vmem>>, %arg5: memref<1x16x64xbf16, #tpu.memory_space<vmem>>) attributes {dimension_semantics = [#tpu.dimension_semantics<parallel>, #tpu.dimension_semantics<parallel>], iteration_bounds = array<i64: 2, 1>, scalar_prefetch = 0 : i64, scratch_operands = 0 : i64, tpu.core_type = #tpu.core_type<tc>, window_params = [{transform_indices = @transform_0, window_bounds = array<i64: 1, 27, 64>}, {pipeline_mode = #tpu.pipeline_mode<synchronous>, transform_indices = @transform_1, window_bounds = array<i64: 16, 27>}, {pipeline_mode = #tpu.pipeline_mode<synchronous>, transform_indices = @transform_2, window_bounds = array<i64: 16, 1>}, {transform_indices = @transform_3, window_bounds = array<i64: 1, 16, 64>}]} {
    %c0 = arith.constant 0 : index
    %c0_0 = arith.constant 0 : index
    %0 = vector.load %arg3[%c0, %c0_0] : memref<16x27xbf16, #tpu.memory_space<vmem>>, vector<16x27xbf16>
    %c0_1 = arith.constant 0 : index
    %c0_2 = arith.constant 0 : index
    %c0_3 = arith.constant 0 : index
    %1 = vector.load %arg2[%c0_1, %c0_2, %c0_3] : memref<1x27x64xbf16, #tpu.memory_space<vmem>>, vector<1x27x64xbf16>
    %2 = vector.shape_cast %1 : vector<1x27x64xbf16> to vector<27x64xbf16>
    %cst = arith.constant dense<0.000000e+00> : vector<16x64xf32>
    %3 = tpu.matmul %0, %2, %cst {dimension_numbers = #tpu.dot_dimension_numbers<[1], [0], [0], [1], [0, 0, 1, 1], [], []>} : vector<16x27xbf16>, vector<27x64xbf16>, vector<16x64xf32> -> vector<16x64xf32>
    %c0_4 = arith.constant 0 : index
    %c0_5 = arith.constant 0 : index
    %4 = vector.load %arg4[%c0_4, %c0_5] : memref<16x1xf32, #tpu.memory_space<vmem>>, vector<16x1xf32>
    %5 = vector.broadcast %4 : vector<16x1xf32> to vector<16x64xf32>
    %6 = arith.addf %3, %5 : vector<16x64xf32>
    %cst_6 = arith.constant 0.000000e+00 : f32
    %7 = vector.broadcast %cst_6 : f32 to vector<16x64xf32>
    %8 = arith.maximumf %6, %7 : vector<16x64xf32>
    %9 = arith.truncf %8 : vector<16x64xf32> to vector<16x64xbf16>
    %c0_7 = arith.constant 0 : index
    %c0_8 = arith.constant 0 : index
    %c0_9 = arith.constant 0 : index
    %10 = vector.load %arg5[%c0_7, %c0_8, %c0_9] : memref<1x16x64xbf16, #tpu.memory_space<vmem>>, vector<1x16x64xbf16>
    %11 = vector.shape_cast %10 : vector<1x16x64xbf16> to vector<16x64xbf16>
    %12 = vector.shape_cast %9 : vector<16x64xbf16> to vector<1x16x64xbf16>
    tpu.vector_store %arg5[%c0_7, %c0_8, %c0_9], %12 {strides = array<i32>} : memref<1x16x64xbf16, #tpu.memory_space<vmem>>, vector<1x16x64xbf16>,
    return
  }
  func.func @transform_0(%arg0: i32, %arg1: i32) -> (i32, i32, i32) {
    %c0_i32 = arith.constant 0 : i32
    %c0_i32_0 = arith.constant 0 : i32
    return %arg0, %c0_i32, %arg1 : i32, i32, i32
  }
  func.func @transform_1(%arg0: i32, %arg1: i32) -> (i32, i32) {
    %c0_i32 = arith.constant 0 : i32
    %c0_i32_0 = arith.constant 0 : i32
    %c0_i32_1 = arith.constant 0 : i32
    return %c0_i32, %c0_i32_0 : i32, i32
  }
  func.func @transform_2(%arg0: i32, %arg1: i32) -> (i32, i32) {
    %c0_i32 = arith.constant 0 : i32
    %c0_i32_0 = arith.constant 0 : i32
    %c0_i32_1 = arith.constant 0 : i32
    return %c0_i32, %c0_i32_0 : i32, i32
  }
  func.func @transform_3(%arg0: i32, %arg1: i32) -> (i32, i32, i32) {
    %c0_i32 = arith.constant 0 : i32
    %c0_i32_0 = arith.constant 0 : i32
    return %arg0, %c0_i32, %arg1 : i32, i32, i32
  }
}

module attributes {stable_mosaic.version = 11 : i64} {
  func.func @_conv_head_fused_kernel(%arg0: i32, %arg1: i32, %arg2: memref<1x144x16xbf16, #tpu.memory_space<vmem>>, %arg3: memref<32x144xbf16, #tpu.memory_space<vmem>>, %arg4: memref<32x1xf32, #tpu.memory_space<vmem>>, %arg5: memref<8x32xbf16, #tpu.memory_space<vmem>>, %arg6: memref<8x1xf32, #tpu.memory_space<vmem>>, %arg7: memref<1x4x16xf32, #tpu.memory_space<vmem>>, %arg8: memref<1x4x16xf32, #tpu.memory_space<vmem>>) attributes {dimension_semantics = [#tpu.dimension_semantics<parallel>, #tpu.dimension_semantics<parallel>], iteration_bounds = array<i64: 2, 1>, scalar_prefetch = 0 : i64, scratch_operands = 0 : i64, tpu.core_type = #tpu.core_type<tc>, window_params = [{transform_indices = @transform_0, window_bounds = array<i64: 1, 144, 16>}, {pipeline_mode = #tpu.pipeline_mode<synchronous>, transform_indices = @transform_1, window_bounds = array<i64: 32, 144>}, {pipeline_mode = #tpu.pipeline_mode<synchronous>, transform_indices = @transform_2, window_bounds = array<i64: 32, 1>}, {pipeline_mode = #tpu.pipeline_mode<synchronous>, transform_indices = @transform_3, window_bounds = array<i64: 8, 32>}, {pipeline_mode = #tpu.pipeline_mode<synchronous>, transform_indices = @transform_4, window_bounds = array<i64: 8, 1>}, {transform_indices = @transform_5, window_bounds = array<i64: 1, 4, 16>}, {transform_indices = @transform_6, window_bounds = array<i64: 1, 4, 16>}]} {
    %c0 = arith.constant 0 : index
    %c0_0 = arith.constant 0 : index
    %0 = vector.load %arg3[%c0, %c0_0] : memref<32x144xbf16, #tpu.memory_space<vmem>>, vector<32x144xbf16>
    %c0_1 = arith.constant 0 : index
    %c0_2 = arith.constant 0 : index
    %c0_3 = arith.constant 0 : index
    %1 = vector.load %arg2[%c0_1, %c0_2, %c0_3] : memref<1x144x16xbf16, #tpu.memory_space<vmem>>, vector<1x144x16xbf16>
    %2 = vector.shape_cast %1 : vector<1x144x16xbf16> to vector<144x16xbf16>
    %cst = arith.constant dense<0.000000e+00> : vector<32x16xf32>
    %3 = tpu.matmul %0, %2, %cst {dimension_numbers = #tpu.dot_dimension_numbers<[1], [0], [0], [1], [0, 0, 1, 1], [], []>} : vector<32x144xbf16>, vector<144x16xbf16>, vector<32x16xf32> -> vector<32x16xf32>
    %c0_4 = arith.constant 0 : index
    %c0_5 = arith.constant 0 : index
    %4 = vector.load %arg4[%c0_4, %c0_5] : memref<32x1xf32, #tpu.memory_space<vmem>>, vector<32x1xf32>
    %5 = vector.broadcast %4 : vector<32x1xf32> to vector<32x16xf32>
    %6 = arith.addf %3, %5 : vector<32x16xf32>
    %cst_6 = arith.constant 0.000000e+00 : f32
    %7 = vector.broadcast %cst_6 : f32 to vector<32x16xf32>
    %8 = arith.maximumf %6, %7 : vector<32x16xf32>
    %c0_7 = arith.constant 0 : index
    %c0_8 = arith.constant 0 : index
    %9 = vector.load %arg5[%c0_7, %c0_8] : memref<8x32xbf16, #tpu.memory_space<vmem>>, vector<8x32xbf16>
    %10 = arith.truncf %8 : vector<32x16xf32> to vector<32x16xbf16>
    %cst_9 = arith.constant dense<0.000000e+00> : vector<8x16xf32>
    %11 = tpu.matmul %9, %10, %cst_9 {dimension_numbers = #tpu.dot_dimension_numbers<[1], [0], [0], [1], [0, 0, 1, 1], [], []>} : vector<8x32xbf16>, vector<32x16xbf16>, vector<8x16xf32> -> vector<8x16xf32>
    %c0_10 = arith.constant 0 : index
    %c0_11 = arith.constant 0 : index
    %12 = vector.load %arg6[%c0_10, %c0_11] : memref<8x1xf32, #tpu.memory_space<vmem>>, vector<8x1xf32>
    %13 = vector.broadcast %12 : vector<8x1xf32> to vector<8x16xf32>
    %14 = arith.addf %11, %13 : vector<8x16xf32>
    %15 = vector.extract_strided_slice %14 {offsets = [0, 0], sizes = [4, 16], strides = [1, 1]} : vector<8x16xf32> to vector<4x16xf32>
    %c0_12 = arith.constant 0 : index
    %c0_13 = arith.constant 0 : index
    %c0_14 = arith.constant 0 : index
    %16 = vector.load %arg7[%c0_12, %c0_13, %c0_14] : memref<1x4x16xf32, #tpu.memory_space<vmem>>, vector<1x4x16xf32>
    %17 = vector.shape_cast %16 : vector<1x4x16xf32> to vector<4x16xf32>
    %18 = vector.shape_cast %15 : vector<4x16xf32> to vector<1x4x16xf32>
    tpu.vector_store %arg7[%c0_12, %c0_13, %c0_14], %18 {strides = array<i32>} : memref<1x4x16xf32, #tpu.memory_space<vmem>>, vector<1x4x16xf32>,
    %19 = vector.extract_strided_slice %14 {offsets = [4, 0], sizes = [4, 16], strides = [1, 1]} : vector<8x16xf32> to vector<4x16xf32>
    %c0_15 = arith.constant 0 : index
    %c0_16 = arith.constant 0 : index
    %c0_17 = arith.constant 0 : index
    %20 = vector.load %arg8[%c0_15, %c0_16, %c0_17] : memref<1x4x16xf32, #tpu.memory_space<vmem>>, vector<1x4x16xf32>
    %21 = vector.shape_cast %20 : vector<1x4x16xf32> to vector<4x16xf32>
    %22 = vector.shape_cast %19 : vector<4x16xf32> to vector<1x4x16xf32>
    tpu.vector_store %arg8[%c0_15, %c0_16, %c0_17], %22 {strides = array<i32>} : memref<1x4x16xf32, #tpu.memory_space<vmem>>, vector<1x4x16xf32>,
    return
  }
  func.func @transform_0(%arg0: i32, %arg1: i32) -> (i32, i32, i32) {
    %c0_i32 = arith.constant 0 : i32
    %c0_i32_0 = arith.constant 0 : i32
    return %arg0, %c0_i32, %arg1 : i32, i32, i32
  }
  func.func @transform_1(%arg0: i32, %arg1: i32) -> (i32, i32) {
    %c0_i32 = arith.constant 0 : i32
    %c0_i32_0 = arith.constant 0 : i32
    %c0_i32_1 = arith.constant 0 : i32
    return %c0_i32, %c0_i32_0 : i32, i32
  }
  func.func @transform_2(%arg0: i32, %arg1: i32) -> (i32, i32) {
    %c0_i32 = arith.constant 0 : i32
    %c0_i32_0 = arith.constant 0 : i32
    %c0_i32_1 = arith.constant 0 : i32
    return %c0_i32, %c0_i32_0 : i32, i32
  }
  func.func @transform_3(%arg0: i32, %arg1: i32) -> (i32, i32) {
    %c0_i32 = arith.constant 0 : i32
    %c0_i32_0 = arith.constant 0 : i32
    %c0_i32_1 = arith.constant 0 : i32
    return %c0_i32, %c0_i32_0 : i32, i32
  }
  func.func @transform_4(%arg0: i32, %arg1: i32) -> (i32, i32) {
    %c0_i32 = arith.constant 0 : i32
    %c0_i32_0 = arith.constant 0 : i32
    %c0_i32_1 = arith.constant 0 : i32
    return %c0_i32, %c0_i32_0 : i32, i32
  }
  func.func @transform_5(%arg0: i32, %arg1: i32) -> (i32, i32, i32) {
    %c0_i32 = arith.constant 0 : i32
    %c0_i32_0 = arith.constant 0 : i32
    return %arg0, %c0_i32, %arg1 : i32, i32, i32
  }
  func.func @transform_6(%arg0: i32, %arg1: i32) -> (i32, i32, i32) {
    %c0_i32 = arith.constant 0 : i32
    %c0_i32_0 = arith.constant 0 : i32
    return %arg0, %c0_i32, %arg1 : i32, i32, i32
  }
}

</mosaic_0001>

<llo_original>
// kernel: detector_forward.2
$region0: #{detector_forward.2}
  #allocation0 [shape = 'u32[]', space=smem, size = 0x4, offset = 0x4, fixed_abs, tag = 'smem constant byte address 0x4 - core index']
  #allocation1 [shape = 'u32[144,128]{1,0:T(1,128)}', space=vmem, size = 0x12000, scoped, tag = 'internal scratch']
  %s0 = inlined_call_operand.vmem [shape: bf16[2,27,64], index: 0, kind: input, shape index: {}]
  %s1 = inlined_call_operand.vmem [shape: bf16[16,27], index: 1, kind: input, shape index: {}]
  %s2 = inlined_call_operand.vmem [shape: f32[16,1], index: 2, kind: input, shape index: {}]
  %s3 = inlined_call_operand.vmem [shape: bf16[2,16,64], index: 3, kind: output, shape index: {}]
  %s4 = sld [smem:[#allocation0]]
  $region45: #{detector_forward.2} parent=0
    _
  %s6 = ssub.s32 1, %s4
  %s7 = scalar_select 0, %s6, %s4
  loop: start=0, step=1, limit=4
  $region2: #{detector_forward.2} parent=0 // loop_pre_header
    _
  $region3: #{detector_forward.2} parent=0 // loop_header
    %s9 = sphi 0, %s13
    %p10 = scmp.ge.s32.totalorder %s9, 4
    %s16 = sphi 0, %s28
    %s17 = sphi 0, %s24
    %s18 = sphi 0, %s16
    %s19 = sphi 0, %s17
    %s20 = sphi 0, %s18
    %s21 = sphi 0, %s19
    %s33 = sphi 0, %s35
    %s36 = sphi 0, %s33
    %s37 = sphi 0, %s36
    %s53 = sphi 0, %s37
    %s57 = sphi 0, %s57
    %s59 = sphi 0, %s57
    %s60 = sphi 0, %s59
    %s74 = sphi 0, %s60
    %s78 = sphi 0, %s78
    %s80 = sphi 0, %s78
    %s81 = sphi 0, %s80
    %s95 = sphi 0, %s81
    %s103 = sphi 0, %s105
    %s106 = sphi 0, %s103
    %s107 = sphi 0, %s106
    %s123 = sphi 0, %s107
  $region4: #{detector_forward.2} parent=0 // loop_header_branch
    %12 = sbr.rel (%p10) target = $region8
  $region5: #{detector_forward.2} parent=0 // loop_body
    %s14 = ssub.s32 %s9, 1
    %s15 = ssub.s32 %s9, 2
    %s22 = sadd.s32 1, %s17
    %p23 = scmp.ge.s32.totalorder %s22, 1
    %s24 = scalar_select %p23, 0, %s22
    %s25 = sadd.s32 1, %s16
    %s26 = scalar_select %p23, %s25, %s16
    %p27 = scmp.ge.s32.totalorder %s26, 2
    %s28 = scalar_select %p27, 0, %s26
    %s29 = ssub.s32 %s16, %s28
    %s30 = ssub.s32 %s17, %s24
    %s31 = sor.u32 %s29, %s30
    %p32 = scmp.eq.s32.totalorder %s31, 0
    %s34 = sadd.s32 %s33, 1
    %s35 = scalar_select %p32, %s33, %s34
    %p38 = pneg %p32
    %p39 = scmp.eq.s32.totalorder %s9, 1
    %p40 = por %p38, %p39
    %p41 = scmp.ne.s32.totalorder %s33, %s36
    %p42 = scmp.eq.s32.totalorder %s9, 0
    %p43 = por %p41, %p42
    %p44 = scmp.ne.s32.totalorder %s33, %s36
    %p45 = scmp.eq.s32.totalorder %s14, 1
    %p46 = por %p44, %p45
    %p47 = scmp.ne.s32.totalorder %s36, %s37
    %p48 = scmp.eq.s32.totalorder %s14, 0
    %p49 = por %p47, %p48
    %p50 = scmp.ne.s32.totalorder %s36, %s37
    %p51 = scmp.eq.s32.totalorder %s15, 1
    %p52 = por %p50, %p51
    %p54 = scmp.ne.s32.totalorder %s37, %s53
    %p55 = scmp.eq.s32.totalorder %s15, 0
    %p56 = por %p54, %p55
    %s58 = sadd.s32 %s57, 1
    %p61 = scmp.eq.s32.totalorder %s9, 1
    %p62 = scmp.ne.s32.totalorder %s57, %s59
    %p63 = scmp.eq.s32.totalorder %s9, 0
    %p64 = por %p62, %p63
    %p65 = scmp.ne.s32.totalorder %s57, %s59
    %p66 = scmp.eq.s32.totalorder %s14, 1
    %p67 = por %p65, %p66
    %p68 = scmp.ne.s32.totalorder %s59, %s60
    %p69 = scmp.eq.s32.totalorder %s14, 0
    %p70 = por %p68, %p69
    %p71 = scmp.ne.s32.totalorder %s59, %s60
    %p72 = scmp.eq.s32.totalorder %s15, 1
    %p73 = por %p71, %p72
    %p75 = scmp.ne.s32.totalorder %s60, %s74
    %p76 = scmp.eq.s32.totalorder %s15, 0
    %p77 = por %p75, %p76
    %s79 = sadd.s32 %s78, 1
    %p82 = scmp.eq.s32.totalorder %s9, 1
    %p83 = scmp.ne.s32.totalorder %s78, %s80
    %p84 = scmp.eq.s32.totalorder %s9, 0
    %p85 = por %p83, %p84
    %p86 = scmp.ne.s32.totalorder %s78, %s80
    %p87 = scmp.eq.s32.totalorder %s14, 1
    %p88 = por %p86, %p87
    %p89 = scmp.ne.s32.totalorder %s80, %s81
    %p90 = scmp.eq.s32.totalorder %s14, 0
    %p91 = por %p89, %p90
    %p92 = scmp.ne.s32.totalorder %s80, %s81
    %p93 = scmp.eq.s32.totalorder %s15, 1
    %p94 = por %p92, %p93
    %p96 = scmp.ne.s32.totalorder %s81, %s95
    %p97 = scmp.eq.s32.totalorder %s15, 0
    %p98 = por %p96, %p97
    %s99 = ssub.s32 %s16, %s28
    %s100 = ssub.s32 %s17, %s24
    %s101 = sor.u32 %s99, %s100
    %p102 = scmp.eq.s32.totalorder %s101, 0
    %s104 = sadd.s32 %s103, 1
    %s105 = scalar_select %p102, %s103, %s104
    %p108 = pneg %p102
    %p109 = scmp.eq.s32.totalorder %s9, 1
    %p110 = por %p108, %p109
    %p111 = scmp.ne.s32.totalorder %s103, %s106
    %p112 = scmp.eq.s32.totalorder %s9, 0
    %p113 = por %p111, %p112
    %p114 = scmp.ne.s32.totalorder %s103, %s106
    %p115 = scmp.eq.s32.totalorder %s14, 1
    %p116 = por %p114, %p115
    %p117 = scmp.ne.s32.totalorder %s106, %s107
    %p118 = scmp.eq.s32.totalorder %s14, 0
    %p119 = por %p117, %p118
    %p120 = scmp.ne.s32.totalorder %s106, %s107
    %p121 = scmp.eq.s32.totalorder %s15, 1
    %p122 = por %p120, %p121
    %p124 = scmp.ne.s32.totalorder %s107, %s123
    %p125 = scmp.eq.s32.totalorder %s15, 0
    %p126 = por %p124, %p125
    %p127 = scmp.le.s32.totalorder 1, %s9
    %p128 = scmp.lt.s32.totalorder %s9, 3
    %p129 = pnand %p127, %p128
    %p130 = pneg %p129
    // Predicated region
    $region9: #{detector_forward.2} parent=5 // pred_check
      _
    $region10: #{detector_forward.2} parent=5 // pred_check_branch
      %132 = sbr.rel (%p129) target = $region12
    $region11: #{detector_forward.2} parent=5 // pred_region
      %s133 = ssub.s32 %s9, 1
      // Predicated region
      $region13: #{detector_forward.2} parent=11 // pred_check
        %p134 = pneg %p70
      $region14: #{detector_forward.2} parent=11 // pred_check_branch
        %136 = sbr.rel (%p134) target = $region16
      $region15: #{detector_forward.2} parent=11 // pred_region
        _
      $region16: #{detector_forward.2} parent=11 // pred_fallthru
        _
      // Predicated region
      $region17: #{detector_forward.2} parent=11 // pred_check
        %p137 = pneg %p91
      $region18: #{detector_forward.2} parent=11 // pred_check_branch
        %139 = sbr.rel (%p137) target = $region20
      $region19: #{detector_forward.2} parent=11 // pred_region
        _
      $region20: #{detector_forward.2} parent=11 // pred_fallthru
        _
    $region12: #{detector_forward.2} parent=5 // pred_fallthru
      _
    %p140 = scmp.lt.s32.totalorder %s9, 2
    // Predicated region
    $region21: #{detector_forward.2} parent=5 // pred_check
      %p141 = pneg %p140
    $region22: #{detector_forward.2} parent=5 // pred_check_branch
      %143 = sbr.rel (%p141) target = $region24
    $region23: #{detector_forward.2} parent=5 // pred_region
      // Predicated region
      $region25: #{detector_forward.2} parent=23 // pred_check
        %p144 = pneg %p43
      $region26: #{detector_forward.2} parent=23 // pred_check_branch
        %146 = sbr.rel (%p144) target = $region28
      $region27: #{detector_forward.2} parent=23 // pred_region
        %p147 = scmp.lt.s32.totalorder %s16, 1
        %s148 = scalar_select %p147, %s16, 1
        %p149 = scmp.lt.s32.totalorder %s17, 0
        %s150 = scalar_select %p149, %s17, 0
        %s151 = smul.addr %s148, 4
        %s152 = sadd.s32 %s150, %s151
        %s153 = smul.addr %s152, 4
        %s154 = scalar_lea.vmem %s0, %s153
      $region28: #{detector_forward.2} parent=23 // pred_fallthru
        _
    $region24: #{detector_forward.2} parent=5 // pred_fallthru
      _
    %p155 = scmp.le.s32.totalorder 1, %s9
    %p156 = scmp.lt.s32.totalorder %s9, 3
    %p157 = pnand %p155, %p156
    %p158 = pneg %p157
    // Predicated region
    $region29: #{detector_forward.2} parent=5 // pred_check
      _
    $region30: #{detector_forward.2} parent=5 // pred_check_branch
      %160 = sbr.rel (%p157) target = $region32
    $region31: #{detector_forward.2} parent=5 // pred_region
      %s161 = ssub.s32 %s9, 1
      %p162 = scmp.lt.s32.totalorder %s18, 1
      %s163 = scalar_select %p162, %s18, 1
      %p164 = scmp.lt.s32.totalorder %s19, 0
      %s165 = scalar_select %p164, %s19, 0
      %s166 = smul.addr %s163, 4
      %s167 = sadd.s32 %s165, %s166
      %s168 = smul.addr %s167, 4
      %s169 = scalar_lea.vmem %s0, %s168
      %p170 = pneg %p49
      %p171 = pneg %p46
      %p172 = pneg %p70
      %p173 = pneg %p67
      %p174 = pneg %p91
      %p175 = pneg %p88
      %p176 = pneg %p119
      %p177 = pneg %p116
      %p178 = scmp.lt.s32.totalorder %s18, 1
      %s179 = scalar_select %p178, %s18, 1
      %p180 = scmp.lt.s32.totalorder %s19, 0
      %s181 = scalar_select %p180, %s19, 0
      %s182 = smul.addr %s179, 2
      %s183 = sadd.s32 %s181, %s182
      %s184 = smul.addr %s183, 4
      %s185 = scalar_lea.vmem %s3, %s184
      %p186 = scmp.lt.s32.totalorder %s18, 1
      %s187 = scalar_select %p186, %s18, 1
      %p188 = scmp.lt.s32.totalorder %s19, 0
      %s189 = scalar_select %p188, %s19, 0
      %s190 = smul.addr %s187, 4
      %s191 = sadd.s32 %s189, %s190
      %s192 = smul.addr %s191, 4
      %s193 = scalar_lea.vmem %s0, %s192
      %p194 = scmp.lt.s32.totalorder %s18, 1
      %s195 = scalar_select %p194, %s18, 1
      %p196 = scmp.lt.s32.totalorder %s19, 0
      %s197 = scalar_select %p196, %s19, 0
      %s198 = smul.addr %s195, 2
      %s199 = sadd.s32 %s197, %s198
      %s200 = smul.addr %s199, 4
      %s201 = scalar_lea.vmem %s3, %s200
      %v203 = vld [vmem:[%s1] sm:$0xf]
      %v204 = vld [vmem:[%s1 + $0x4] sm:$0xf]
      %v205 = vld [vmem:[%s193] sm:$0xf]
      %v206 = vld [vmem:[%s193 + $0x4] sm:$0xf]
      %v207 = vld [vmem:[%s193 + $0x8] sm:$0xf]
      %v208 = vld [vmem:[%s193 + $0xc] sm:$0x3]
      %v209 = vld [vmem:[%s2] sm:$0xff]
      %v210 = vld [vmem:[%s2 + $0x8] sm:$0xff]
      %212 = vset.pattern.permute.xlu0 0
      %213 = vperm.xlu0 %212, %v209
      %v214 = vpop.permute.xlu0 %213
      %217 = vset.pattern.permute.xlu0 0
      %218 = vperm.xlu0 %217, %v210
      %v219 = vpop.permute.xlu0 %218
      %v223 = vunpack.c.l.b16 %v203
      %v224 = vunpack.c.l.b16 %v204
      %v225 = vpack.c.b16 %v224, %v223
      %v230 = vunpack.c.l.b16 %v205
      %v231 = vunpack.c.l.b16 %v206
      %v232 = vunpack.c.l.b16 %v207
      %v233 = vunpack.c.l.b16 %v208
      %v234 = vpack.c.b16 %v231, %v230
      %v235 = vpack.c.b16 %v233, %v232
      %vm237 = vcmask 220160
      %v239 = vsel %vm237, %v225, 0
      %vm241 = vcmask 1044480
      %vm242 = vcmask 1045504
      %v243 = vsel %vm241, 4294967295, 65535
      %v244 = vsel %vm242, %v243, 0
      %v246 = vand.u32 %v235, %v244
      %248 = vmatprep.subr.bf16.mxu0 0
      %249 = vmatpush1.bf16.msra.mxu0 %v234
      %250 = vmatprep.subr.bf16.mxu0 0
      %251 = vmatpush1.bf16.msra.mxu0 %v246
      %252 = vmatprep.subr.bf16.mxu0 0
      %253 = vmatpush1.bf16.msra.mxu0 0
      %254 = vmatprep.subr.bf16.mxu0 0
      %255 = vmatpush1.bf16.msra.mxu0 0
      %256 = vmatprep.subr.bf16.mxu0 0
      %257 = vmatpush1.bf16.msra.mxu0 0
      %258 = vmatprep.subr.bf16.mxu0 0
      %259 = vmatpush1.bf16.msra.mxu0 0
      %260 = vmatprep.subr.bf16.mxu0 0
      %261 = vmatpush1.bf16.msra.mxu0 0
      %262 = vmatprep.subr.bf16.mxu0 0
      %263 = vmatpush1.bf16.msra.mxu0 0
      %264 = vmatprep.subr.bf16.mxu0 0
      %265 = vmatpush1.bf16.msra.mxu0 0
      %266 = vmatprep.subr.bf16.mxu0 0
      %267 = vmatpush1.bf16.msra.mxu0 0
      %268 = vmatprep.subr.bf16.mxu0 0
      %269 = vmatpush1.bf16.msra.mxu0 0
      %270 = vmatprep.subr.bf16.mxu0 0
      %271 = vmatpush1.bf16.msra.mxu0 0
      %272 = vmatprep.subr.bf16.mxu0 0
      %273 = vmatpush1.bf16.msra.mxu0 0
      %274 = vmatprep.subr.bf16.mxu0 0
      %275 = vmatpush1.bf16.msra.mxu0 0
      %276 = vmatprep.subr.bf16.mxu0 0
      %277 = vmatpush1.bf16.msra.mxu0 0
      %278 = vmatprep.subr.bf16.mxu0 0
      %279 = vmatpush1.bf16.msra.mxu0 0
      %280 = vmatprep.mubr.bf16.mxu0 0
      %281 = vmatmul.mubr.bf16.gmra.mrb[0].mxu0 %v239
      %v282 = vpop.f32.mrb[0].mxu0
      %v283 = vadd.f32 %v214, %v282
      %v284 = vpop.f32.mrb[0].mxu0
      %v285 = vpop.f32.mrb[0].mxu0
      %v286 = vadd.f32 %v219, %v285
      %v287 = vpop.f32.mrb[0].mxu0
      %288 = vdwg.mxu0
      %v289 = vmax.f32 %v283, 0.0
      %v290 = vmax.f32 %v286, 0.0
      %v291 = vpack.c.bf16 %v290, %v289
      %v293 = vunpack.c.l.b16 %v291
      %v294 = vunpack.c.h.b16 %v291
      %v295 = vpack.c.b16 %v293, %v293
      %v296 = vpack.c.b16 %v294, %v294
      %vm299 = vcmask 519168
      %300 = vst.msk [vmem:[%s201] sm:$0xf] %vm299, %v295
      %301 = vst.msk [vmem:[%s201 + $0x4] sm:$0xf] %vm299, %v296
      %p302 = scmp.lt.s32.totalorder %s18, 1
      %s303 = scalar_select %p302, %s18, 1
      %p304 = scmp.lt.s32.totalorder %s19, 0
      %s305 = scalar_select %p304, %s19, 0
      %s306 = smul.addr %s303, 2
      %s307 = sadd.s32 %s305, %s306
      %s308 = smul.addr %s307, 4
      %s309 = scalar_lea.vmem %s3, %s308
      // Predicated region
      $region33: #{detector_forward.2} parent=31 // pred_check
        %p310 = pneg %p116
      $region34: #{detector_forward.2} parent=31 // pred_check_branch
        %312 = sbr.rel (%p310) target = $region36
      $region35: #{detector_forward.2} parent=31 // pred_region
        _
      $region36: #{detector_forward.2} parent=31 // pred_fallthru
        _
    $region32: #{detector_forward.2} parent=5 // pred_fallthru
      _
    %p313 = scmp.le.s32.totalorder 2, %s9
    // Predicated region
    $region37: #{detector_forward.2} parent=5 // pred_check
      %p314 = pneg %p313
    $region38: #{detector_forward.2} parent=5 // pred_check_branch
      %316 = sbr.rel (%p314) target = $region40
    $region39: #{detector_forward.2} parent=5 // pred_region
      %s317 = ssub.s32 %s9, 2
      // Predicated region
      $region41: #{detector_forward.2} parent=39 // pred_check
        %p318 = pneg %p122
      $region42: #{detector_forward.2} parent=39 // pred_check_branch
        %320 = sbr.rel (%p318) target = $region44
      $region43: #{detector_forward.2} parent=39 // pred_region
        %p321 = scmp.lt.s32.totalorder %s20, 1
        %s322 = scalar_select %p321, %s20, 1
        %p323 = scmp.lt.s32.totalorder %s21, 0
        %s324 = scalar_select %p323, %s21, 0
        %s325 = smul.addr %s322, 2
        %s326 = sadd.s32 %s324, %s325
        %s327 = smul.addr %s326, 4
        %s328 = scalar_lea.vmem %s3, %s327
      $region44: #{detector_forward.2} parent=39 // pred_fallthru
        _
    $region40: #{detector_forward.2} parent=5 // pred_fallthru
      _
  $region6: #{detector_forward.2} parent=0 // loop_footer
    %s13 = sadd.s32 1, %s9
  $region7: #{detector_forward.2} parent=0 // loop_footer_branch
    %8 = sbr.rel target = $region3
  $region8: #{detector_forward.2} parent=0 // loop_exit
    _

// kernel: detector_forward.3
$region0: #{detector_forward.3}
  #allocation0 [shape = 'u32[]', space=smem, size = 0x4, offset = 0x4, fixed_abs, tag = 'smem constant byte address 0x4 - core index']
  #allocation1 [shape = 'u32[144,128]{1,0:T(1,128)}', space=vmem, size = 0x12000, scoped, tag = 'internal scratch']
  %s0 = inlined_call_operand.vmem [shape: bf16[2,144,16], index: 0, kind: input, shape index: {}]
  %s1 = inlined_call_operand.vmem [shape: bf16[32,144], index: 1, kind: input, shape index: {}]
  %s2 = inlined_call_operand.vmem [shape: f32[32,1], index: 2, kind: input, shape index: {}]
  %s3 = inlined_call_operand.vmem [shape: bf16[8,32], index: 3, kind: input, shape index: {}]
  %s4 = inlined_call_operand.vmem [shape: f32[8,1], index: 4, kind: input, shape index: {}]
  %s5 = inlined_call_operand.vmem [shape: f32[2,4,16], index: 5, kind: output, shape index: {0}]
  %s6 = inlined_call_operand.vmem [shape: f32[2,4,16], index: 6, kind: output, shape index: {1}]
  %7 = xla_tuple %s5, %s6
  %s8 = sld [smem:[#allocation0]]
  $region61: #{detector_forward.3} parent=0
    _
  %s10 = ssub.s32 1, %s8
  %s11 = scalar_select 0, %s10, %s8
  loop: start=0, step=1, limit=4
  $region2: #{detector_forward.3} parent=0 // loop_pre_header
    _
  $region3: #{detector_forward.3} parent=0 // loop_header
    %s13 = sphi 0, %s17
    %p14 = scmp.ge.s32.totalorder %s13, 4
    %s20 = sphi 0, %s32
    %s21 = sphi 0, %s28
    %s22 = sphi 0, %s20
    %s23 = sphi 0, %s21
    %s24 = sphi 0, %s22
    %s25 = sphi 0, %s23
    %s37 = sphi 0, %s39
    %s40 = sphi 0, %s37
    %s41 = sphi 0, %s40
    %s57 = sphi 0, %s41
    %s61 = sphi 0, %s61
    %s63 = sphi 0, %s61
    %s64 = sphi 0, %s63
    %s78 = sphi 0, %s64
    %s82 = sphi 0, %s82
    %s84 = sphi 0, %s82
    %s85 = sphi 0, %s84
    %s99 = sphi 0, %s85
    %s103 = sphi 0, %s103
    %s105 = sphi 0, %s103
    %s106 = sphi 0, %s105
    %s120 = sphi 0, %s106
    %s124 = sphi 0, %s124
    %s126 = sphi 0, %s124
    %s127 = sphi 0, %s126
    %s141 = sphi 0, %s127
    %s149 = sphi 0, %s151
    %s152 = sphi 0, %s149
    %s153 = sphi 0, %s152
    %s169 = sphi 0, %s153
    %s177 = sphi 0, %s179
    %s180 = sphi 0, %s177
    %s181 = sphi 0, %s180
    %s197 = sphi 0, %s181
  $region4: #{detector_forward.3} parent=0 // loop_header_branch
    %16 = sbr.rel (%p14) target = $region8
  $region5: #{detector_forward.3} parent=0 // loop_body
    %s18 = ssub.s32 %s13, 1
    %s19 = ssub.s32 %s13, 2
    %s26 = sadd.s32 1, %s21
    %p27 = scmp.ge.s32.totalorder %s26, 1
    %s28 = scalar_select %p27, 0, %s26
    %s29 = sadd.s32 1, %s20
    %s30 = scalar_select %p27, %s29, %s20
    %p31 = scmp.ge.s32.totalorder %s30, 2
    %s32 = scalar_select %p31, 0, %s30
    %s33 = ssub.s32 %s20, %s32
    %s34 = ssub.s32 %s21, %s28
    %s35 = sor.u32 %s33, %s34
    %p36 = scmp.eq.s32.totalorder %s35, 0
    %s38 = sadd.s32 %s37, 1
    %s39 = scalar_select %p36, %s37, %s38
    %p42 = pneg %p36
    %p43 = scmp.eq.s32.totalorder %s13, 1
    %p44 = por %p42, %p43
    %p45 = scmp.ne.s32.totalorder %s37, %s40
    %p46 = scmp.eq.s32.totalorder %s13, 0
    %p47 = por %p45, %p46
    %p48 = scmp.ne.s32.totalorder %s37, %s40
    %p49 = scmp.eq.s32.totalorder %s18, 1
    %p50 = por %p48, %p49
    %p51 = scmp.ne.s32.totalorder %s40, %s41
    %p52 = scmp.eq.s32.totalorder %s18, 0
    %p53 = por %p51, %p52
    %p54 = scmp.ne.s32.totalorder %s40, %s41
    %p55 = scmp.eq.s32.totalorder %s19, 1
    %p56 = por %p54, %p55
    %p58 = scmp.ne.s32.totalorder %s41, %s57
    %p59 = scmp.eq.s32.totalorder %s19, 0
    %p60 = por %p58, %p59
    %s62 = sadd.s32 %s61, 1
    %p65 = scmp.eq.s32.totalorder %s13, 1
    %p66 = scmp.ne.s32.totalorder %s61, %s63
    %p67 = scmp.eq.s32.totalorder %s13, 0
    %p68 = por %p66, %p67
    %p69 = scmp.ne.s32.totalorder %s61, %s63
    %p70 = scmp.eq.s32.totalorder %s18, 1
    %p71 = por %p69, %p70
    %p72 = scmp.ne.s32.totalorder %s63, %s64
    %p73 = scmp.eq.s32.totalorder %s18, 0
    %p74 = por %p72, %p73
    %p75 = scmp.ne.s32.totalorder %s63, %s64
    %p76 = scmp.eq.s32.totalorder %s19, 1
    %p77 = por %p75, %p76
    %p79 = scmp.ne.s32.totalorder %s64, %s78
    %p80 = scmp.eq.s32.totalorder %s19, 0
    %p81 = por %p79, %p80
    %s83 = sadd.s32 %s82, 1
    %p86 = scmp.eq.s32.totalorder %s13, 1
    %p87 = scmp.ne.s32.totalorder %s82, %s84
    %p88 = scmp.eq.s32.totalorder %s13, 0
    %p89 = por %p87, %p88
    %p90 = scmp.ne.s32.totalorder %s82, %s84
    %p91 = scmp.eq.s32.totalorder %s18, 1
    %p92 = por %p90, %p91
    %p93 = scmp.ne.s32.totalorder %s84, %s85
    %p94 = scmp.eq.s32.totalorder %s18, 0
    %p95 = por %p93, %p94
    %p96 = scmp.ne.s32.totalorder %s84, %s85
    %p97 = scmp.eq.s32.totalorder %s19, 1
    %p98 = por %p96, %p97
    %p100 = scmp.ne.s32.totalorder %s85, %s99
    %p101 = scmp.eq.s32.totalorder %s19, 0
    %p102 = por %p100, %p101
    %s104 = sadd.s32 %s103, 1
    %p107 = scmp.eq.s32.totalorder %s13, 1
    %p108 = scmp.ne.s32.totalorder %s103, %s105
    %p109 = scmp.eq.s32.totalorder %s13, 0
    %p110 = por %p108, %p109
    %p111 = scmp.ne.s32.totalorder %s103, %s105
    %p112 = scmp.eq.s32.totalorder %s18, 1
    %p113 = por %p111, %p112
    %p114 = scmp.ne.s32.totalorder %s105, %s106
    %p115 = scmp.eq.s32.totalorder %s18, 0
    %p116 = por %p114, %p115
    %p117 = scmp.ne.s32.totalorder %s105, %s106
    %p118 = scmp.eq.s32.totalorder %s19, 1
    %p119 = por %p117, %p118
    %p121 = scmp.ne.s32.totalorder %s106, %s120
    %p122 = scmp.eq.s32.totalorder %s19, 0
    %p123 = por %p121, %p122
    %s125 = sadd.s32 %s124, 1
    %p128 = scmp.eq.s32.totalorder %s13, 1
    %p129 = scmp.ne.s32.totalorder %s124, %s126
    %p130 = scmp.eq.s32.totalorder %s13, 0
    %p131 = por %p129, %p130
    %p132 = scmp.ne.s32.totalorder %s124, %s126
    %p133 = scmp.eq.s32.totalorder %s18, 1
    %p134 = por %p132, %p133
    %p135 = scmp.ne.s32.totalorder %s126, %s127
    %p136 = scmp.eq.s32.totalorder %s18, 0
    %p137 = por %p135, %p136
    %p138 = scmp.ne.s32.totalorder %s126, %s127
    %p139 = scmp.eq.s32.totalorder %s19, 1
    %p140 = por %p138, %p139
    %p142 = scmp.ne.s32.totalorder %s127, %s141
    %p143 = scmp.eq.s32.totalorder %s19, 0
    %p144 = por %p142, %p143
    %s145 = ssub.s32 %s20, %s32
    %s146 = ssub.s32 %s21, %s28
    %s147 = sor.u32 %s145, %s146
    %p148 = scmp.eq.s32.totalorder %s147, 0
    %s150 = sadd.s32 %s149, 1
    %s151 = scalar_select %p148, %s149, %s150
    %p154 = pneg %p148
    %p155 = scmp.eq.s32.totalorder %s13, 1
    %p156 = por %p154, %p155
    %p157 = scmp.ne.s32.totalorder %s149, %s152
    %p158 = scmp.eq.s32.totalorder %s13, 0
    %p159 = por %p157, %p158
    %p160 = scmp.ne.s32.totalorder %s149, %s152
    %p161 = scmp.eq.s32.totalorder %s18, 1
    %p162 = por %p160, %p161
    %p163 = scmp.ne.s32.totalorder %s152, %s153
    %p164 = scmp.eq.s32.totalorder %s18, 0
    %p165 = por %p163, %p164
    %p166 = scmp.ne.s32.totalorder %s152, %s153
    %p167 = scmp.eq.s32.totalorder %s19, 1
    %p168 = por %p166, %p167
    %p170 = scmp.ne.s32.totalorder %s153, %s169
    %p171 = scmp.eq.s32.totalorder %s19, 0
    %p172 = por %p170, %p171
    %s173 = ssub.s32 %s20, %s32
    %s174 = ssub.s32 %s21, %s28
    %s175 = sor.u32 %s173, %s174
    %p176 = scmp.eq.s32.totalorder %s175, 0
    %s178 = sadd.s32 %s177, 1
    %s179 = scalar_select %p176, %s177, %s178
    %p182 = pneg %p176
    %p183 = scmp.eq.s32.totalorder %s13, 1
    %p184 = por %p182, %p183
    %p185 = scmp.ne.s32.totalorder %s177, %s180
    %p186 = scmp.eq.s32.totalorder %s13, 0
    %p187 = por %p185, %p186
    %p188 = scmp.ne.s32.totalorder %s177, %s180
    %p189 = scmp.eq.s32.totalorder %s18, 1
    %p190 = por %p188, %p189
    %p191 = scmp.ne.s32.totalorder %s180, %s181
    %p192 = scmp.eq.s32.totalorder %s18, 0
    %p193 = por %p191, %p192
    %p194 = scmp.ne.s32.totalorder %s180, %s181
    %p195 = scmp.eq.s32.totalorder %s19, 1
    %p196 = por %p194, %p195
    %p198 = scmp.ne.s32.totalorder %s181, %s197
    %p199 = scmp.eq.s32.totalorder %s19, 0
    %p200 = por %p198, %p199
    %p201 = scmp.le.s32.totalorder 1, %s13
    %p202 = scmp.lt.s32.totalorder %s13, 3
    %p203 = pnand %p201, %p202
    %p204 = pneg %p203
    // Predicated region
    $region9: #{detector_forward.3} parent=5 // pred_check
      _
    $region10: #{detector_forward.3} parent=5 // pred_check_branch
      %206 = sbr.rel (%p203) target = $region12
    $region11: #{detector_forward.3} parent=5 // pred_region
      %s207 = ssub.s32 %s13, 1
      // Predicated region
      $region13: #{detector_forward.3} parent=11 // pred_check
        %p208 = pneg %p74
      $region14: #{detector_forward.3} parent=11 // pred_check_branch
        %210 = sbr.rel (%p208) target = $region16
      $region15: #{detector_forward.3} parent=11 // pred_region
        _
      $region16: #{detector_forward.3} parent=11 // pred_fallthru
        _
      // Predicated region
      $region17: #{detector_forward.3} parent=11 // pred_check
        %p211 = pneg %p95
      $region18: #{detector_forward.3} parent=11 // pred_check_branch
        %213 = sbr.rel (%p211) target = $region20
      $region19: #{detector_forward.3} parent=11 // pred_region
        _
      $region20: #{detector_forward.3} parent=11 // pred_fallthru
        _
      // Predicated region
      $region21: #{detector_forward.3} parent=11 // pred_check
        %p214 = pneg %p116
      $region22: #{detector_forward.3} parent=11 // pred_check_branch
        %216 = sbr.rel (%p214) target = $region24
      $region23: #{detector_forward.3} parent=11 // pred_region
        _
      $region24: #{detector_forward.3} parent=11 // pred_fallthru
        _
      // Predicated region
      $region25: #{detector_forward.3} parent=11 // pred_check
        %p217 = pneg %p137
      $region26: #{detector_forward.3} parent=11 // pred_check_branch
        %219 = sbr.rel (%p217) target = $region28
      $region27: #{detector_forward.3} parent=11 // pred_region
        _
      $region28: #{detector_forward.3} parent=11 // pred_fallthru
        _
    $region12: #{detector_forward.3} parent=5 // pred_fallthru
      _
    %p220 = scmp.lt.s32.totalorder %s13, 2
    // Predicated region
    $region29: #{detector_forward.3} parent=5 // pred_check
      %p221 = pneg %p220
    $region30: #{detector_forward.3} parent=5 // pred_check_branch
      %223 = sbr.rel (%p221) target = $region32
    $region31: #{detector_forward.3} parent=5 // pred_region
      // Predicated region
      $region33: #{detector_forward.3} parent=31 // pred_check
        %p224 = pneg %p47
      $region34: #{detector_forward.3} parent=31 // pred_check_branch
        %226 = sbr.rel (%p224) target = $region36
      $region35: #{detector_forward.3} parent=31 // pred_region
        %p227 = scmp.lt.s32.totalorder %s20, 1
        %s228 = scalar_select %p227, %s20, 1
        %p229 = scmp.lt.s32.totalorder %s21, 0
        %s230 = scalar_select %p229, %s21, 0
        %s231 = smul.addr %s228, 18
        %s232 = sadd.s32 %s230, %s231
        %s233 = smul.addr %s232, 4
        %s234 = scalar_lea.vmem %s0, %s233
      $region36: #{detector_forward.3} parent=31 // pred_fallthru
        _
    $region32: #{detector_forward.3} parent=5 // pred_fallthru
      _
    %p235 = scmp.le.s32.totalorder 1, %s13
    %p236 = scmp.lt.s32.totalorder %s13, 3
    %p237 = pnand %p235, %p236
    %p238 = pneg %p237
    // Predicated region
    $region37: #{detector_forward.3} parent=5 // pred_check
      _
    $region38: #{detector_forward.3} parent=5 // pred_check_branch
      %240 = sbr.rel (%p237) target = $region40
    $region39: #{detector_forward.3} parent=5 // pred_region
      %s241 = ssub.s32 %s13, 1
      %p242 = scmp.lt.s32.totalorder %s22, 1
      %s243 = scalar_select %p242, %s22, 1
      %p244 = scmp.lt.s32.totalorder %s23, 0
      %s245 = scalar_select %p244, %s23, 0
      %s246 = smul.addr %s243, 18
      %s247 = sadd.s32 %s245, %s246
      %s248 = smul.addr %s247, 4
      %s249 = scalar_lea.vmem %s0, %s248
      %p250 = pneg %p53
      %p251 = pneg %p50
      %p252 = pneg %p74
      %p253 = pneg %p71
      %p254 = pneg %p95
      %p255 = pneg %p92
      %p256 = pneg %p116
      %p257 = pneg %p113
      %p258 = pneg %p137
      %p259 = pneg %p134
      %p260 = pneg %p165
      %p261 = pneg %p162
      %p262 = scmp.lt.s32.totalorder %s22, 1
      %s263 = scalar_select %p262, %s22, 1
      %p264 = scmp.lt.s32.totalorder %s23, 0
      %s265 = scalar_select %p264, %s23, 0
      %s266 = sadd.s32 %s265, %s263
      %s267 = smul.addr %s266, 4
      %s268 = scalar_lea.vmem %s5, %s267
      %p269 = pneg %p193
      %p270 = pneg %p190
      %p271 = scmp.lt.s32.totalorder %s22, 1
      %s272 = scalar_select %p271, %s22, 1
      %p273 = scmp.lt.s32.totalorder %s23, 0
      %s274 = scalar_select %p273, %s23, 0
      %s275 = sadd.s32 %s274, %s272
      %s276 = smul.addr %s275, 4
      %s277 = scalar_lea.vmem %s6, %s276
      %p278 = scmp.lt.s32.totalorder %s22, 1
      %s279 = scalar_select %p278, %s22, 1
      %p280 = scmp.lt.s32.totalorder %s23, 0
      %s281 = scalar_select %p280, %s23, 0
      %s282 = smul.addr %s279, 18
      %s283 = sadd.s32 %s281, %s282
      %s284 = smul.addr %s283, 4
      %s285 = scalar_lea.vmem %s0, %s284
      %p286 = scmp.lt.s32.totalorder %s22, 1
      %s287 = scalar_select %p286, %s22, 1
      %p288 = scmp.lt.s32.totalorder %s23, 0
      %s289 = scalar_select %p288, %s23, 0
      %s290 = sadd.s32 %s289, %s287
      %s291 = smul.addr %s290, 4
      %s292 = scalar_lea.vmem %s5, %s291
      %p293 = scmp.lt.s32.totalorder %s22, 1
      %s294 = scalar_select %p293, %s22, 1
      %p295 = scmp.lt.s32.totalorder %s23, 0
      %s296 = scalar_select %p295, %s23, 0
      %s297 = sadd.s32 %s296, %s294
      %s298 = smul.addr %s297, 4
      %s299 = scalar_lea.vmem %s6, %s298
      %v301 = vld [vmem:[%s1] sm:$0xff]
      %v302 = vld [vmem:[%s1 + $0x8] sm:$0xff]
      %v303 = vld [vmem:[%s1 + $0x10] sm:$0xff]
      %v304 = vld [vmem:[%s1 + $0x18] sm:$0xff]
      %v305 = vld [vmem:[%s285] sm:$0xf]
      %v306 = vld [vmem:[%s285 + $0x4] sm:$0xf]
      %v307 = vld [vmem:[%s285 + $0x8] sm:$0xf]
      %v308 = vld [vmem:[%s285 + $0xc] sm:$0xf]
      %v309 = vld [vmem:[%s285 + $0x10] sm:$0xf]
      %v310 = vld [vmem:[%s285 + $0x14] sm:$0xf]
      %v311 = vld [vmem:[%s285 + $0x18] sm:$0xf]
      %v312 = vld [vmem:[%s285 + $0x1c] sm:$0xf]
      %v313 = vld [vmem:[%s285 + $0x20] sm:$0xf]
      %v314 = vld [vmem:[%s285 + $0x24] sm:$0xf]
      %v315 = vld [vmem:[%s285 + $0x28] sm:$0xf]
      %v316 = vld [vmem:[%s285 + $0x2c] sm:$0xf]
      %v317 = vld [vmem:[%s285 + $0x30] sm:$0xf]
      %v318 = vld [vmem:[%s285 + $0x34] sm:$0xf]
      %v319 = vld [vmem:[%s285 + $0x38] sm:$0xf]
      %v320 = vld [vmem:[%s285 + $0x3c] sm:$0xf]
      %v321 = vld [vmem:[%s285 + $0x40] sm:$0xf]
      %v322 = vld [vmem:[%s285 + $0x44] sm:$0xf]
      %v323 = vld [vmem:[%s2] sm:$0xff]
      %v324 = vld [vmem:[%s2 + $0x8] sm:$0xff]
      %v325 = vld [vmem:[%s2 + $0x10] sm:$0xff]
      %v326 = vld [vmem:[%s2 + $0x18] sm:$0xff]
      %328 = vset.pattern.permute.xlu0 0
      %329 = vperm.xlu0 %328, %v323
      %v330 = vpop.permute.xlu0 %329
      %333 = vset.pattern.permute.xlu0 0
      %334 = vperm.xlu0 %333, %v324
      %v335 = vpop.permute.xlu0 %334
      %338 = vset.pattern.permute.xlu0 0
      %339 = vperm.xlu0 %338, %v325
      %v340 = vpop.permute.xlu0 %339
      %343 = vset.pattern.permute.xlu0 0
      %344 = vperm.xlu0 %343, %v326
      %v345 = vpop.permute.xlu0 %344
      %v351 = vunpack.c.l.b16 %v301
      %v352 = vunpack.c.h.b16 %v301
      %v353 = vunpack.c.l.b16 %v302
      %v354 = vunpack.c.h.b16 %v302
      %v355 = vunpack.c.l.b16 %v303
      %v356 = vunpack.c.h.b16 %v303
      %v357 = vunpack.c.l.b16 %v304
      %v358 = vunpack.c.h.b16 %v304
      %v359 = vpack.c.b16 %v353, %v351
      %v360 = vpack.c.b16 %v354, %v352
      %v361 = vpack.c.b16 %v357, %v355
      %v362 = vpack.c.b16 %v358, %v356
      %v383 = vunpack.c.l.b16 %v305
      %v384 = vunpack.c.l.b16 %v306
      %v385 = vunpack.c.l.b16 %v307
      %v386 = vunpack.c.l.b16 %v308
      %v387 = vunpack.c.l.b16 %v309
      %v388 = vunpack.c.l.b16 %v310
      %v389 = vunpack.c.l.b16 %v311
      %v390 = vunpack.c.l.b16 %v312
      %v391 = vunpack.c.l.b16 %v313
      %v392 = vunpack.c.l.b16 %v314
      %v393 = vunpack.c.l.b16 %v315
      %v394 = vunpack.c.l.b16 %v316
      %v395 = vunpack.c.l.b16 %v317
      %v396 = vunpack.c.l.b16 %v318
      %v397 = vunpack.c.l.b16 %v319
      %v398 = vunpack.c.l.b16 %v320
      %v399 = vunpack.c.l.b16 %v321
      %v400 = vunpack.c.l.b16 %v322
      %v401 = vpack.c.b16 %v384, %v383
      %v402 = vpack.c.b16 %v386, %v385
      %v403 = vpack.c.b16 %v388, %v387
      %v404 = vpack.c.b16 %v390, %v389
      %v405 = vpack.c.b16 %v392, %v391
      %v406 = vpack.c.b16 %v394, %v393
      %v407 = vpack.c.b16 %v396, %v395
      %v408 = vpack.c.b16 %v398, %v397
      %v409 = vpack.c.b16 %v400, %v399
      %vm419 = vcmask 130048
      %v421 = vsel %vm419, %v360, 0
      %v424 = vsel %vm419, %v362, 0
      %426 = vmatprep.subr.bf16.mxu0 0
      %427 = vmatpush1.bf16.msra.mxu0 %v401
      %428 = vmatprep.subr.bf16.mxu0 0
      %429 = vmatpush1.bf16.msra.mxu0 %v402
      %430 = vmatprep.subr.bf16.mxu0 0
      %431 = vmatpush1.bf16.msra.mxu0 %v403
      %432 = vmatprep.subr.bf16.mxu0 0
      %433 = vmatpush1.bf16.msra.mxu0 %v404
      %434 = vmatprep.subr.bf16.mxu0 0
      %435 = vmatpush1.bf16.msra.mxu0 %v405
      %436 = vmatprep.subr.bf16.mxu0 0
      %437 = vmatpush1.bf16.msra.mxu0 %v406
      %438 = vmatprep.subr.bf16.mxu0 0
      %439 = vmatpush1.bf16.msra.mxu0 %v407
      %440 = vmatprep.subr.bf16.mxu0 0
      %441 = vmatpush1.bf16.msra.mxu0 %v408
      %442 = vmatprep.subr.bf16.mxu0 0
      %443 = vmatpush1.bf16.msra.mxu0 %v409
      %444 = vmatprep.subr.bf16.mxu0 0
      %445 = vmatpush1.bf16.msra.mxu0 0
      %446 = vmatprep.subr.bf16.mxu0 0
      %447 = vmatpush1.bf16.msra.mxu0 0
      %448 = vmatprep.subr.bf16.mxu0 0
      %449 = vmatpush1.bf16.msra.mxu0 0
      %450 = vmatprep.subr.bf16.mxu0 0
      %451 = vmatpush1.bf16.msra.mxu0 0
      %452 = vmatprep.subr.bf16.mxu0 0
      %453 = vmatpush1.bf16.msra.mxu0 0
      %454 = vmatprep.subr.bf16.mxu0 0
      %455 = vmatpush1.bf16.msra.mxu0 0
      %456 = vmatprep.subr.bf16.mxu0 0
      %457 = vmatpush1.bf16.msra.mxu0 0
      %458 = vmatprep.mubr.bf16.mxu0 %v421
      %459 = vmatmul.mubr.bf16.gmra.mrb[0].mxu0 %v359
      %v460 = vpop.f32.mrb[0].mxu0
      %v461 = vadd.f32 %v330, %v460
      %v462 = vpop.f32.mrb[0].mxu0
      %v463 = vpop.f32.mrb[0].mxu0
      %v464 = vadd.f32 %v335, %v463
      %v465 = vpop.f32.mrb[0].mxu0
      %466 = vmatprep.mubr.bf16.mxu0 %v424
      %467 = vmatmul.mubr.bf16.gmra.mrb[0].mxu0 %v361
      %v468 = vpop.f32.mrb[0].mxu0
      %v469 = vadd.f32 %v340, %v468
      %v470 = vpop.f32.mrb[0].mxu0
      %v471 = vpop.f32.mrb[0].mxu0
      %v472 = vadd.f32 %v345, %v471
      %v473 = vpop.f32.mrb[0].mxu0
      %474 = vdwg.mxu0
      %v475 = vmax.f32 %v461, 0.0
      %v476 = vmax.f32 %v464, 0.0
      %v477 = vmax.f32 %v469, 0.0
      %v478 = vmax.f32 %v472, 0.0
      %v479 = vld [vmem:[%s3] sm:$0xf]
      %v480 = vpack.c.bf16 %v476, %v475
      %v481 = vpack.c.bf16 %v478, %v477
      %v482 = vld [vmem:[%s4] sm:$0xff]
      %484 = vset.pattern.permute.xlu0 0
      %485 = vperm.xlu0 %484, %v482
      %v486 = vpop.permute.xlu0 %485
      %vm488 = vcmask 261120
      %v490 = vsel %vm488, %v479, 0
      %492 = vmatprep.subr.bf16.mxu0 0
      %493 = vmatpush1.bf16.msra.mxu0 %v480
      %494 = vmatprep.subr.bf16.mxu0 0
      %495 = vmatpush1.bf16.msra.mxu0 %v481
      %496 = vmatprep.subr.bf16.mxu0 0
      %497 = vmatpush1.bf16.msra.mxu0 0
      %498 = vmatprep.subr.bf16.mxu0 0
      %499 = vmatpush1.bf16.msra.mxu0 0
      %500 = vmatprep.subr.bf16.mxu0 0
      %501 = vmatpush1.bf16.msra.mxu0 0
      %502 = vmatprep.subr.bf16.mxu0 0
      %503 = vmatpush1.bf16.msra.mxu0 0
      %504 = vmatprep.subr.bf16.mxu0 0
      %505 = vmatpush1.bf16.msra.mxu0 0
      %506 = vmatprep.subr.bf16.mxu0 0
      %507 = vmatpush1.bf16.msra.mxu0 0
      %508 = vmatprep.subr.bf16.mxu0 0
      %509 = vmatpush1.bf16.msra.mxu0 0
      %510 = vmatprep.subr.bf16.mxu0 0
      %511 = vmatpush1.bf16.msra.mxu0 0
      %512 = vmatprep.subr.bf16.mxu0 0
      %513 = vmatpush1.bf16.msra.mxu0 0
      %514 = vmatprep.subr.bf16.mxu0 0
      %515 = vmatpush1.bf16.msra.mxu0 0
      %516 = vmatprep.subr.bf16.mxu0 0
      %517 = vmatpush1.bf16.msra.mxu0 0
      %518 = vmatprep.subr.bf16.mxu0 0
      %519 = vmatpush1.bf16.msra.mxu0 0
      %520 = vmatprep.subr.bf16.mxu0 0
      %521 = vmatpush1.bf16.msra.mxu0 0
      %522 = vmatprep.subr.bf16.mxu0 0
      %523 = vmatpush1.bf16.msra.mxu0 0
      %524 = vmatprep.mubr.bf16.mxu0 0
      %525 = vmatmul.mubr.bf16.gmra.mrb[0].mxu0 %v490
      %v526 = vpop.f32.mrb[0].mxu0
      %v527 = vadd.f32 %v486, %v526
      %v528 = vpop.f32.mrb[0].mxu0
      %v529 = vpop.f32.mrb[0].mxu0
      %v530 = vpop.f32.mrb[0].mxu0
      %531 = vdwg.mxu0
      %vm532 = vcmask 125952
      %533 = vst.msk [vmem:[%s292] sm:$0xf] %vm532, %v527
      %vm534 = vcmask 130052
      %535 = vst.msk [vmem:[%s299 - $0x4] sm:$0xf0] %vm534, %v527
      %p536 = scmp.lt.s32.totalorder %s22, 1
      %s537 = scalar_select %p536, %s22, 1
      %p538 = scmp.lt.s32.totalorder %s23, 0
      %s539 = scalar_select %p538, %s23, 0
      %s540 = sadd.s32 %s539, %s537
      %s541 = smul.addr %s540, 4
      %s542 = scalar_lea.vmem %s5, %s541
      %p543 = scmp.lt.s32.totalorder %s22, 1
      %s544 = scalar_select %p543, %s22, 1
      %p545 = scmp.lt.s32.totalorder %s23, 0
      %s546 = scalar_select %p545, %s23, 0
      %s547 = sadd.s32 %s546, %s544
      %s548 = smul.addr %s547, 4
      %s549 = scalar_lea.vmem %s6, %s548
      // Predicated region
      $region41: #{detector_forward.3} parent=39 // pred_check
        %p550 = pneg %p162
      $region42: #{detector_forward.3} parent=39 // pred_check_branch
        %552 = sbr.rel (%p550) target = $region44
      $region43: #{detector_forward.3} parent=39 // pred_region
        _
      $region44: #{detector_forward.3} parent=39 // pred_fallthru
        _
      // Predicated region
      $region45: #{detector_forward.3} parent=39 // pred_check
        %p553 = pneg %p190
      $region46: #{detector_forward.3} parent=39 // pred_check_branch
        %555 = sbr.rel (%p553) target = $region48
      $region47: #{detector_forward.3} parent=39 // pred_region
        _
      $region48: #{detector_forward.3} parent=39 // pred_fallthru
        _
    $region40: #{detector_forward.3} parent=5 // pred_fallthru
      _
    %p556 = scmp.le.s32.totalorder 2, %s13
    // Predicated region
    $region49: #{detector_forward.3} parent=5 // pred_check
      %p557 = pneg %p556
    $region50: #{detector_forward.3} parent=5 // pred_check_branch
      %559 = sbr.rel (%p557) target = $region52
    $region51: #{detector_forward.3} parent=5 // pred_region
      %s560 = ssub.s32 %s13, 2
      // Predicated region
      $region53: #{detector_forward.3} parent=51 // pred_check
        %p561 = pneg %p168
      $region54: #{detector_forward.3} parent=51 // pred_check_branch
        %563 = sbr.rel (%p561) target = $region56
      $region55: #{detector_forward.3} parent=51 // pred_region
        %p564 = scmp.lt.s32.totalorder %s24, 1
        %s565 = scalar_select %p564, %s24, 1
        %p566 = scmp.lt.s32.totalorder %s25, 0
        %s567 = scalar_select %p566, %s25, 0
        %s568 = sadd.s32 %s567, %s565
        %s569 = smul.addr %s568, 4
        %s570 = scalar_lea.vmem %s5, %s569
      $region56: #{detector_forward.3} parent=51 // pred_fallthru
        _
      // Predicated region
      $region57: #{detector_forward.3} parent=51 // pred_check
        %p571 = pneg %p196
      $region58: #{detector_forward.3} parent=51 // pred_check_branch
        %573 = sbr.rel (%p571) target = $region60
      $region59: #{detector_forward.3} parent=51 // pred_region
        %p574 = scmp.lt.s32.totalorder %s24, 1
        %s575 = scalar_select %p574, %s24, 1
        %p576 = scmp.lt.s32.totalorder %s25, 0
        %s577 = scalar_select %p576, %s25, 0
        %s578 = sadd.s32 %s577, %s575
        %s579 = smul.addr %s578, 4
        %s580 = scalar_lea.vmem %s6, %s579
      $region60: #{detector_forward.3} parent=51 // pred_fallthru
        _
    $region52: #{detector_forward.3} parent=5 // pred_fallthru
      _
  $region6: #{detector_forward.3} parent=0 // loop_footer
    %s17 = sadd.s32 1, %s13
  $region7: #{detector_forward.3} parent=0 // loop_footer_branch
    %12 = sbr.rel target = $region3
  $region8: #{detector_forward.3} parent=0 // loop_exit
    _

</llo_original>
